<compile_context>
chip_gen: v7x
topology: tpu7x:2x2x1
jax: 0.10.0
libtpu: 0.0.40
codegen_flags: <defaults>
</compile_context>

<pallas_src>
import jax
import jax.numpy as jnp
from jax.experimental import pallas as pl
from jax.experimental.pallas import tpu as pltpu


def _round_up(x, m):
    return ((x + m - 1) // m) * m


def _linear_kernel(x_ref, w_ref, b_ref, o_ref):
    # x_ref: (tile_b, F), w_ref: (F, out_pad), b_ref: (1, out_pad) f32,
    # o_ref: (tile_b, out_pad).  MXU accumulate in f32, bias add in f32,
    # single cast at the end (safe for bf16 inputs on v5e too).
    acc = jnp.dot(x_ref[...], w_ref[...], preferred_element_type=jnp.float32)
    o_ref[...] = (acc + b_ref[...]).astype(o_ref.dtype)


def _select_out_pad(num_features):
    # Narrow features: 8-wide padded output (cuts wasted writeback / weight
    # HBM traffic ~16x vs a 128-wide pad).  Wide features: 128-wide
    # lane-dense unmasked stores.
    return 128 if num_features >= 512 else 8


def pad_linear_params(weight, bias, x_dtype):
    """Pad (2, F) weight / (2,) bias to TPU-friendly (F, out_pad) / (1, out_pad).

    Do this once per weight and reuse across forward calls (avoids
    re-materializing the padded weight from HBM on every call).
    """
    out_dim, num_features = weight.shape
    out_pad = _select_out_pad(num_features)
    w_pad = (
        jnp.zeros((num_features, out_pad), dtype=x_dtype)
        .at[:, :out_dim]
        .set(weight.T.astype(x_dtype))
    )
    b_pad = (
        jnp.zeros((1, out_pad), dtype=jnp.float32)
        .at[:, :out_dim]
        .set(bias.astype(jnp.float32))
    )
    return w_pad, b_pad


def _derive_tiling(batch, num_features, itemsize):
    """Pick (tile_b, B_pad, vmem_limit_bytes)."""
    align = 8 if itemsize >= 4 else 16
    b_ceil = _round_up(batch, align)

    # Cap the x tile at ~4 MiB / 1024 rows: streaming kernels already hit
    # ~85% of the HBM roofline at 512-1024 row tiles, and per-step overhead
    # (~0.35 us) makes extra steps nearly free.
    rows_from_bytes = (4 << 20) // max(1, num_features * itemsize)
    tile_b = min(1024, max(align, rows_from_bytes))
    tile_b = max(align, (tile_b // align) * align)
    tile_b = min(tile_b, b_ceil)

    # Guarantee >= 4 grid steps when the batch allows: >= 2 overlapped steps
    # per v7x TensorCore ("parallel" sharding) and read/write pipeline
    # overlap on single-TC v5e/v6e.
    min_steps = 4
    if b_ceil >= min_steps * align:
        max_tile = max(align, (b_ceil // min_steps) // align * align)
        tile_b = min(tile_b, max_tile)

    # Prefer an even step count so neither v7x TC idles on a tail step.
    steps = pl.cdiv(b_ceil, tile_b)
    if steps >= min_steps and steps % 2 == 1:
        cand = max(align, _round_up(pl.cdiv(b_ceil, steps + 1), align))
        if pl.cdiv(b_ceil, cand) % 2 == 0:
            tile_b = cand

    B_pad = _round_up(batch, tile_b)

    # Conservative VMEM usage: double-buffered x / out tiles, weight + bias
    # counted as double-buffered (Pallas allocates 2 buffers even with a
    # constant index_map), plus the f32 accumulator / (acc + b) temporaries.
    lane = 128
    f_lane = _round_up(num_features, lane)
    f_sub = _round_up(num_features, 8)
    usage = (
        2 * tile_b * f_lane * itemsize                  # x tiles
        + 2 * tile_b * lane * itemsize                  # output tiles
        + 2 * (f_sub * lane * itemsize + lane * 4)      # weight + bias
        + 2 * tile_b * lane * 4                         # f32 accumulator / temp
    )
    vmem_limit = usage + (8 << 20)                      # compiler scratch headroom
    vmem_limit = max(16 << 20, min(vmem_limit, 48 << 20))  # legal on v7x 64 MiB/TC
    return int(tile_b), int(B_pad), int(vmem_limit)


def probing_forward_padded(x, w_pad, b_pad, out_dim=2):
    """y = x @ W^T + b using pre-padded params from pad_linear_params()."""
    B, F = x.shape
    out_pad = w_pad.shape[1]
    itemsize = jnp.dtype(x.dtype).itemsize

    tile_b, B_pad, vmem_limit = _derive_tiling(B, F, itemsize)

    if B_pad != B:
        x = jnp.pad(x, ((0, B_pad - B), (0, 0)))

    grid = (B_pad // tile_b,)

    cost = pl.CostEstimate(
        flops=2 * B_pad * F * out_pad,
        transcendentals=0,
        bytes_accessed=(
            B_pad * F * itemsize            # x read
            + B_pad * out_pad * itemsize    # y write
            + F * out_pad * itemsize        # weight read
            + out_pad * 4                   # bias read
        ),
    )

    out_padded = pl.pallas_call(
        _linear_kernel,
        out_shape=jax.ShapeDtypeStruct((B_pad, out_pad), x.dtype),
        grid_spec=pltpu.PrefetchScalarGridSpec(
            num_scalar_prefetch=0,
            grid=grid,
            in_specs=[
                pl.BlockSpec((tile_b, F), lambda i: (i, 0)),     # x tile (pipelined)
                pl.BlockSpec((F, out_pad), lambda i: (0, 0)),    # resident weight
                pl.BlockSpec((1, out_pad), lambda i: (0, 0)),    # resident bias
            ],
            out_specs=pl.BlockSpec((tile_b, out_pad), lambda i: (i, 0)),
        ),
        compiler_params=pltpu.CompilerParams(
            dimension_semantics=("parallel",),
            vmem_limit_bytes=vmem_limit,
        ),
        cost_estimate=cost,
    )(x, w_pad, b_pad)

    return out_padded[:B, :out_dim]


def probing_model_forward(x, weight, bias, *, force_kernel=False):
    """nn.Linear(num_features, 2) forward: y = x @ weight.T + bias.

    For repeated calls with the same weights, prefer
    pad_linear_params() + probing_forward_padded() so the weight padding is
    done once instead of per call.
    """
    B, F = x.shape
    out_dim, F_w = weight.shape
    assert F == F_w, "weight feature dim mismatch"
    itemsize = jnp.dtype(x.dtype).itemsize

    # Tiny problems: pad ops + kernel launch + grid overhead dwarf the work.
    # Very large F: the resident weight would blow VMEM.
    # TODO(synk): add a K-split (reduction grid axis) path instead of the
    # plain-dot fallback when num_features is too large for a VMEM-resident
    # weight.
    weight_vmem = 2 * _round_up(F, 8) * 128 * itemsize
    if not force_kernel and (B * F * itemsize < (1 << 20) or weight_vmem > (32 << 20)):
        y = (x.astype(jnp.float32) @ weight.T.astype(jnp.float32)
             + bias.astype(jnp.float32))
        return y.astype(x.dtype)

    w_pad, b_pad = pad_linear_params(weight, bias, x.dtype)
    return probing_forward_padded(x, w_pad, b_pad, out_dim=out_dim)


if __name__ == "__main__":
    # Small shapes consistent with the module: batch=8, num_features=32.
    batch, num_features, out_dim = 8, 32, 2

    key = jax.random.PRNGKey(0)
    kx, kw, kb = jax.random.split(key, 3)

    x = jax.random.normal(kx, (batch, num_features), dtype=jnp.float32)
    # Deterministic init mimicking nn.Linear's uniform(-1/sqrt(F), 1/sqrt(F)).
    bound = 1.0 / jnp.sqrt(jnp.float32(num_features))
    weight = jax.random.uniform(
        kw, (out_dim, num_features), minval=-bound, maxval=bound, dtype=jnp.float32
    )
    bias = jax.random.uniform(
        kb, (out_dim,), minval=-bound, maxval=bound, dtype=jnp.float32
    )

    # Small shape: force the Pallas path (would otherwise short-circuit).
    y = probing_model_forward(x, weight, bias, force_kernel=True)
    y = jax.block_until_ready(y)
    y_ref = x @ weight.T + bias
    assert y.shape == (batch, out_dim)
    assert jnp.allclose(y, y_ref, atol=1e-5, rtol=1e-5)

    # Larger batch: exercises the multi-step (>=4, even) pipelined grid and
    # the pre-padded-params API.
    xb = jax.random.normal(kx, (2048, 256), dtype=jnp.float32)
    wb = jax.random.uniform(
        kw, (out_dim, 256), minval=-0.1, maxval=0.1, dtype=jnp.float32
    )
    bb = jax.random.uniform(kb, (out_dim,), minval=-0.1, maxval=0.1, dtype=jnp.float32)
    w_pad, b_pad = pad_linear_params(wb, bb, xb.dtype)
    yb = jax.block_until_ready(probing_forward_padded(xb, w_pad, b_pad, out_dim=out_dim))
    yb_ref = xb @ wb.T + bb
    assert jnp.allclose(yb, yb_ref, atol=1e-4, rtol=1e-4)

    print("KERNEL_OK")
</pallas_src>

<mosaic_0001>
module attributes {stable_mosaic.version = 11 : i64} {
  func.func @_linear_kernel(%arg0: i32, %arg1: memref<8x32xf32, #tpu.memory_space<vmem>>, %arg2: memref<32x8xf32, #tpu.memory_space<vmem>>, %arg3: memref<1x8xf32, #tpu.memory_space<vmem>>, %arg4: memref<8x8xf32, #tpu.memory_space<vmem>>) attributes {dimension_semantics = [#tpu.dimension_semantics<parallel>], iteration_bounds = array<i64: 1>, scalar_prefetch = 0 : i64, scratch_operands = 0 : i64, tpu.core_type = #tpu.core_type<tc>, window_params = [{transform_indices = @transform_0, window_bounds = array<i64: 8, 32>}, {pipeline_mode = #tpu.pipeline_mode<synchronous>, transform_indices = @transform_1, window_bounds = array<i64: 32, 8>}, {pipeline_mode = #tpu.pipeline_mode<synchronous>, transform_indices = @transform_2, window_bounds = array<i64: 1, 8>}, {transform_indices = @transform_3, window_bounds = array<i64: 8, 8>}]} {
    %c0 = arith.constant 0 : index
    %c0_0 = arith.constant 0 : index
    %0 = vector.load %arg1[%c0, %c0_0] : memref<8x32xf32, #tpu.memory_space<vmem>>, vector<8x32xf32>
    %c0_1 = arith.constant 0 : index
    %c0_2 = arith.constant 0 : index
    %1 = vector.load %arg2[%c0_1, %c0_2] : memref<32x8xf32, #tpu.memory_space<vmem>>, vector<32x8xf32>
    %cst = arith.constant dense<0.000000e+00> : vector<8x8xf32>
    %2 = tpu.matmul %0, %1, %cst {dimension_numbers = #tpu.dot_dimension_numbers<[1], [0], [0], [1], [0, 0, 1, 1], [], []>} : vector<8x32xf32>, vector<32x8xf32>, vector<8x8xf32> -> vector<8x8xf32>
    %c0_3 = arith.constant 0 : index
    %c0_4 = arith.constant 0 : index
    %3 = vector.load %arg3[%c0_3, %c0_4] : memref<1x8xf32, #tpu.memory_space<vmem>>, vector<1x8xf32>
    %4 = vector.broadcast %3 : vector<1x8xf32> to vector<8x8xf32>
    %5 = arith.addf %2, %4 : vector<8x8xf32>
    %c0_5 = arith.constant 0 : index
    %c0_6 = arith.constant 0 : index
    %6 = vector.load %arg4[%c0_5, %c0_6] : memref<8x8xf32, #tpu.memory_space<vmem>>, vector<8x8xf32>
    tpu.vector_store %arg4[%c0_5, %c0_6], %5 {strides = array<i32>} : memref<8x8xf32, #tpu.memory_space<vmem>>, vector<8x8xf32>,
    return
  }
  func.func @transform_0(%arg0: i32) -> (i32, i32) {
    %c0_i32 = arith.constant 0 : i32
    %c0_i32_0 = arith.constant 0 : i32
    return %arg0, %c0_i32 : i32, i32
  }
  func.func @transform_1(%arg0: i32) -> (i32, i32) {
    %c0_i32 = arith.constant 0 : i32
    %c0_i32_0 = arith.constant 0 : i32
    %c0_i32_1 = arith.constant 0 : i32
    return %c0_i32, %c0_i32_0 : i32, i32
  }
  func.func @transform_2(%arg0: i32) -> (i32, i32) {
    %c0_i32 = arith.constant 0 : i32
    %c0_i32_0 = arith.constant 0 : i32
    %c0_i32_1 = arith.constant 0 : i32
    return %c0_i32, %c0_i32_0 : i32, i32
  }
  func.func @transform_3(%arg0: i32) -> (i32, i32) {
    %c0_i32 = arith.constant 0 : i32
    %c0_i32_0 = arith.constant 0 : i32
    return %arg0, %c0_i32 : i32, i32
  }
}

</mosaic_0001>

<llo_original>
// kernel: tpu_custom_call.1
$region0: #{tpu_custom_call.1}
  #allocation0 [shape = 'u32[]', space=smem, size = 0x4, offset = 0x4, fixed_abs, tag = 'smem constant byte address 0x4 - core index']
  #allocation1 [shape = 'u32[144,128]{1,0:T(1,128)}', space=vmem, size = 0x12000, scoped, tag = 'internal scratch']
  %s0 = inlined_call_operand.vmem [shape: f32[8,32], index: 0, kind: input, shape index: {}]
  %s1 = inlined_call_operand.vmem [shape: f32[32,8], index: 1, kind: input, shape index: {}]
  %s2 = inlined_call_operand.vmem [shape: f32[1,8], index: 2, kind: input, shape index: {}]
  %s3 = inlined_call_operand.hbm [shape: f32[8,8], index: 3, kind: output, shape index: {}]
  %s4 = sld [smem:[#allocation0]]
  $region22: #{tpu_custom_call.1} parent=0
    _
  %s6 = ssub.s32 1, %s4
  %s7 = scalar_select 0, %s6, %s4
  $region1: #{tpu_custom_call.1} parent=0
    #allocation2 [shape = 'u8[4096]{0}', space=vmem, size = 0x1000, scoped, tag = 'output window, operand 0, single buffered']
    #allocation3 [shape = 's32[1]{0}', space=sflag, size = 0x4, scoped, tag = 'scoped memory for tpu_custom_call.1']
    %8 = vsyncpa [#allocation3], 0
    // Predicated region
    $region2: #{tpu_custom_call.1} parent=1 // pred_check
      _
    $region3: #{tpu_custom_call.1} parent=1 // pred_check_branch
      %10 = sbr.rel (0) target = $region5
    $region4: #{tpu_custom_call.1} parent=1 // pred_region
      _
    $region5: #{tpu_custom_call.1} parent=1 // pred_fallthru
      _
    // Predicated region
    $region6: #{tpu_custom_call.1} parent=1 // pred_check
      _
    $region7: #{tpu_custom_call.1} parent=1 // pred_check_branch
      %12 = sbr.rel (0) target = $region9
    $region8: #{tpu_custom_call.1} parent=1 // pred_region
      _
    $region9: #{tpu_custom_call.1} parent=1 // pred_fallthru
      _
    // Predicated region
    $region10: #{tpu_custom_call.1} parent=1 // pred_check
      _
    $region11: #{tpu_custom_call.1} parent=1 // pred_check_branch
      %14 = sbr.rel (0) target = $region13
    $region12: #{tpu_custom_call.1} parent=1 // pred_region
      _
    $region13: #{tpu_custom_call.1} parent=1 // pred_fallthru
      _
    %v15 = vld [vmem:[%s0] sm:$0xff]
    %v16 = vld [vmem:[%s1] sm:$0xff]
    %v17 = vld [vmem:[%s1 + $0x8] sm:$0xff]
    %v18 = vld [vmem:[%s1 + $0x10] sm:$0xff]
    %v19 = vld [vmem:[%s1 + $0x18] sm:$0xff]
    %v20 = vld [vmem:[%s2] sm:$0x1]
    %v22 = vlaneseq
    %v23 = vshrl.u32 %v22, 7
    %v24 = vsub.s32 0, %v23
    %v25 = vrot.slane %v20, %v24
    %vm27 = vcmask 261120
    %v29 = vsel %vm27, %v15, 0
    %31 = vmatprep.subr.mxu0 0.0
    %32 = vmatpush1.msra.mxu0 %v16
    %33 = vmatprep.subr.mxu0 0.0
    %34 = vmatpush1.msra.mxu0 %v17
    %35 = vmatprep.subr.mxu0 0.0
    %36 = vmatpush1.msra.mxu0 %v18
    %37 = vmatprep.subr.mxu0 0.0
    %38 = vmatpush1.msra.mxu0 %v19
    %39 = vmatprep.subr.mxu0 0.0
    %40 = vmatpush1.msra.mxu0 0.0
    %41 = vmatprep.subr.mxu0 0.0
    %42 = vmatpush1.msra.mxu0 0.0
    %43 = vmatprep.subr.mxu0 0.0
    %44 = vmatpush1.msra.mxu0 0.0
    %45 = vmatprep.subr.mxu0 0.0
    %46 = vmatpush1.msra.mxu0 0.0
    %47 = vmatprep.subr.mxu0 0.0
    %48 = vmatpush1.msra.mxu0 0.0
    %49 = vmatprep.subr.mxu0 0.0
    %50 = vmatpush1.msra.mxu0 0.0
    %51 = vmatprep.subr.mxu0 0.0
    %52 = vmatpush1.msra.mxu0 0.0
    %53 = vmatprep.subr.mxu0 0.0
    %54 = vmatpush1.msra.mxu0 0.0
    %55 = vmatprep.subr.mxu0 0.0
    %56 = vmatpush1.msra.mxu0 0.0
    %57 = vmatprep.subr.mxu0 0.0
    %58 = vmatpush1.msra.mxu0 0.0
    %59 = vmatprep.subr.mxu0 0.0
    %60 = vmatpush1.msra.mxu0 0.0
    %61 = vmatprep.subr.mxu0 0.0
    %62 = vmatpush1.msra.mxu0 0.0
    %63 = vmatprep.subr.mxu0 0.0
    %64 = vmatpush1.msra.mxu0 0.0
    %65 = vmatprep.subr.mxu0 0.0
    %66 = vmatpush1.msra.mxu0 0.0
    %67 = vmatprep.subr.mxu0 0.0
    %68 = vmatpush1.msra.mxu0 0.0
    %69 = vmatprep.subr.mxu0 0.0
    %70 = vmatpush1.msra.mxu0 0.0
    %71 = vmatprep.subr.mxu0 0.0
    %72 = vmatpush1.msra.mxu0 0.0
    %73 = vmatprep.subr.mxu0 0.0
    %74 = vmatpush1.msra.mxu0 0.0
    %75 = vmatprep.subr.mxu0 0.0
    %76 = vmatpush1.msra.mxu0 0.0
    %77 = vmatprep.subr.mxu0 0.0
    %78 = vmatpush1.msra.mxu0 0.0
    %79 = vmatprep.subr.mxu0 0.0
    %80 = vmatpush1.msra.mxu0 0.0
    %81 = vmatprep.subr.mxu0 0.0
    %82 = vmatpush1.msra.mxu0 0.0
    %83 = vmatprep.subr.mxu0 0.0
    %84 = vmatpush1.msra.mxu0 0.0
    %85 = vmatprep.subr.mxu0 0.0
    %86 = vmatpush1.msra.mxu0 0.0
    %87 = vmatprep.subr.mxu0 0.0
    %88 = vmatpush1.msra.mxu0 0.0
    %89 = vmatprep.subr.mxu0 0.0
    %90 = vmatpush1.msra.mxu0 0.0
    %91 = vmatprep.subr.mxu0 0.0
    %92 = vmatpush1.msra.mxu0 0.0
    %93 = vmatprep.subr.mxu0 0.0
    %94 = vmatpush1.msra.mxu0 0.0
    %95 = vmatprep.mubr.f32.mxu0 0.0
    %96 = vmatmul.mubr.f32.gmra.mrb[0].mxu0 %v29
    %v97 = vpop.f32.mrb[0].mxu0
    %v98 = vadd.f32 %v25, %v97
    %v99 = vpop.f32.mrb[0].mxu0
    %100 = vdwg.mxu0
    %vm101 = vcmask 64512
    %102 = vst.msk [vmem:[#allocation2] sm:$0xff] %vm101, %v98
    // Predicated region
    $region14: #{tpu_custom_call.1} parent=1 // pred_check
      _
    $region15: #{tpu_custom_call.1} parent=1 // pred_check_branch
      %104 = sbr.rel (0) target = $region17
    $region16: #{tpu_custom_call.1} parent=1 // pred_region
      %s106 = ssub.s32 128, 128
      %107 = vsyncadd [#allocation3], %s106
      %s109 = sshll.u32 [#allocation2], 4
      %s110 = int_to_ptr.vmem [resolvable:$true] %s109
      %112 = dma.vmem_to_hbm [thread:$0]  %s110, 128, %s3, [#allocation3]
    $region17: #{tpu_custom_call.1} parent=1 // pred_fallthru
      _
    // Predicated region
    $region18: #{tpu_custom_call.1} parent=1 // pred_check
      _
    $region19: #{tpu_custom_call.1} parent=1 // pred_check_branch
      %114 = sbr.rel (0) target = $region21
    $region20: #{tpu_custom_call.1} parent=1 // pred_region
      %115 = dma.done [#allocation3], 128
    $region21: #{tpu_custom_call.1} parent=1 // pred_fallthru
      _
    %116 = vsyncpa [#allocation3], 1

</llo_original>
